<compile_context>
chip_gen: v6e
topology: v6e:2x2x1
jax: 0.10.0
libtpu: 0.0.40
codegen_flags: <defaults>
</compile_context>

<pallas_src>
import functools

import jax
import jax.numpy as jnp
import numpy as np
from jax.experimental import pallas as pl
from jax.experimental.pallas import tpu as pltpu

_LANE = 128      # lane width (last dim)
_SUBLANE = 8     # sublane width (second-to-last dim)


def _round_up(n, m):
    return ((n + m - 1) // m) * m


def _pad2d(x, rows, cols):
    r, c = x.shape
    return jnp.pad(x, ((0, rows - r), (0, cols - c)))


# ----------------------------- fused Pallas kernel ------------------------- #

def _fused_mlp_kernel(idx_ref, x_ref, *refs, n_layers, m_rows):
    """Gather train_mask rows, then run all Linear(+ReLU) layers VMEM-resident.

    Argument order (after the SMEM scalar-prefetch idx_ref):
      x_ref, w0, b0, w1, b1, ..., w_{L-1}, b_{L-1}, o_ref, gx_scratch
    """
    wb_refs = refs[: 2 * n_layers]
    o_ref = refs[2 * n_layers]
    gx_ref = refs[2 * n_layers + 1]

    # Row gather (torch.index_select) into VMEM scratch. This commutes with the
    # MLP because Linear/ReLU have no cross-row coupling.
    for r in range(m_rows):                     # m_rows is small & static
        gx_ref[pl.ds(r, 1), :] = x_ref[pl.ds(idx_ref[r], 1), :]

    h = gx_ref[...]                             # (M_pad, D_pad) float32
    for li in range(n_layers):
        w = wb_refs[2 * li][...]
        b = wb_refs[2 * li + 1][...]
        h = jnp.dot(h, w, preferred_element_type=jnp.float32) + b
        if li < n_layers - 1:                   # final layer: no ReLU
            h = jnp.maximum(h, 0.0)
    o_ref[...] = h.astype(o_ref.dtype)


def mlp_forward(node_features, params, train_mask):
    """Pallas forward: probs = MLP(node_features)[train_mask]."""
    n_layers = len(params)
    N, D = node_features.shape
    M = train_mask.shape[0]
    C = params[-1][0].shape[1]

    Np = _round_up(N, _SUBLANE)                 # 17 -> 24 rows
    Mp = _round_up(M, _SUBLANE)                 # 8  -> 8  rows
    Dp = _round_up(D, _LANE)                    # 32 -> 128 lanes

    # Zero-pad to lane/sublane-dense shapes (exact: zero rows/cols contribute 0).
    x_p = _pad2d(node_features.astype(jnp.float32), Np, Dp)
    # Padded gather indices point at row 0 (the all-zero row); sliced off below.
    idx_p = jnp.pad(train_mask.astype(jnp.int32), (0, Mp - M))

    dims_out = [_round_up(w.shape[1], _LANE) for (w, _) in params]
    dims_in = [Dp] + dims_out[:-1]
    padded_wb = []
    for (w, b), di, do in zip(params, dims_in, dims_out):
        padded_wb.append(_pad2d(w.astype(jnp.float32), di, do))
        padded_wb.append(_pad2d(b.astype(jnp.float32), 1, do))
    Cp = dims_out[-1]

    kernel = functools.partial(_fused_mlp_kernel, n_layers=n_layers, m_rows=Mp)

    in_specs = [pl.BlockSpec((Np, Dp), lambda i, idx: (0, 0))]
    for di, do in zip(dims_in, dims_out):
        in_specs.append(pl.BlockSpec((di, do), lambda i, idx: (0, 0)))
        in_specs.append(pl.BlockSpec((1, do), lambda i, idx: (0, 0)))

    out = pl.pallas_call(
        kernel,
        out_shape=jax.ShapeDtypeStruct((Mp, Cp), jnp.float32),
        grid_spec=pltpu.PrefetchScalarGridSpec(
            num_scalar_prefetch=1,
            grid=(1,),
            in_specs=in_specs,
            out_specs=pl.BlockSpec((Mp, Cp), lambda i, idx: (0, 0)),
            scratch_shapes=[pltpu.VMEM((Mp, Dp), jnp.float32)],
        ),
        compiler_params=pltpu.CompilerParams(
            dimension_semantics=("arbitrary",),
        ),
    )(idx_p, x_p, *padded_wb)

    return out[:M, :C]


# ------------------------------ params & reference ------------------------- #

def init_mlp_params(key, input_dim, hidden, num_layers, num_classes):
    """Deterministic nn.Linear-style init: U(-1/sqrt(fan_in), 1/sqrt(fan_in))."""
    dims = [input_dim] + [hidden] * (num_layers - 1) + [num_classes]
    params = []
    for i in range(num_layers):
        fan_in, fan_out = dims[i], dims[i + 1]
        key, kw, kb = jax.random.split(key, 3)
        bound = 1.0 / np.sqrt(fan_in)
        w = jax.random.uniform(kw, (fan_in, fan_out), jnp.float32, -bound, bound)
        b = jax.random.uniform(kb, (1, fan_out), jnp.float32, -bound, bound)
        params.append((w, b))
    return params


def mlp_forward_ref(node_features, params, train_mask):
    x = node_features
    n_layers = len(params)
    for li, (w, b) in enumerate(params):
        x = x @ w + b
        if li < n_layers - 1:
            x = jnp.maximum(x, 0.0)
    return jnp.take(x, train_mask, axis=0)


# --------------------------------- main ------------------------------------ #

if __name__ == "__main__":
    # Config implied by the module: USE_FEATURES=True.
    num_entities = 16
    input_dim = 32          # initial_features.shape[1]
    hidden = 32             # GCN_DIM
    num_layers = 3          # LAYERS
    num_classes = 8         # NUM_CLASSES

    key = jax.random.PRNGKey(0)
    key, kf, km = jax.random.split(key, 3)

    initial_features = jax.random.normal(kf, (num_entities, input_dim), jnp.float32)
    # node_features = cat([zeros(1, D), initial_features])  -> (N+1, D)
    node_features = jnp.concatenate(
        [jnp.zeros((1, input_dim), jnp.float32), initial_features], axis=0
    )

    params = init_mlp_params(key, input_dim, hidden, num_layers, num_classes)

    # train_mask: row indices into node_features (0 .. num_entities inclusive)
    train_mask = jax.random.randint(km, (8,), 0, num_entities + 1, dtype=jnp.int32)

    probs = mlp_forward(node_features, params, train_mask)
    probs = jax.block_until_ready(probs)

    ref = mlp_forward_ref(node_features, params, train_mask)
    assert probs.shape == (train_mask.shape[0], num_classes)
    assert np.allclose(np.asarray(probs), np.asarray(ref), rtol=1e-5, atol=1e-5)

    print("KERNEL_OK")
</pallas_src>

<mosaic_0001>
module attributes {stable_mosaic.version = 11 : i64} {
  func.func @_fused_mlp_kernel(%arg0: i32, %arg1: memref<8xi32, #tpu.memory_space<smem>>, %arg2: memref<24x128xf32, #tpu.memory_space<vmem>>, %arg3: memref<128x128xf32, #tpu.memory_space<vmem>>, %arg4: memref<1x128xf32, #tpu.memory_space<vmem>>, %arg5: memref<128x128xf32, #tpu.memory_space<vmem>>, %arg6: memref<1x128xf32, #tpu.memory_space<vmem>>, %arg7: memref<128x128xf32, #tpu.memory_space<vmem>>, %arg8: memref<1x128xf32, #tpu.memory_space<vmem>>, %arg9: memref<8x128xf32, #tpu.memory_space<vmem>>, %arg10: memref<8x128xf32, #tpu.memory_space<vmem>>) attributes {dimension_semantics = [#tpu.dimension_semantics<arbitrary>], iteration_bounds = array<i64: 1>, scalar_prefetch = 1 : i64, scratch_operands = 1 : i64, tpu.core_type = #tpu.core_type<tc>, window_params = [{pipeline_mode = #tpu.pipeline_mode<synchronous>, transform_indices = @transform_0, window_bounds = array<i64: 24, 128>}, {pipeline_mode = #tpu.pipeline_mode<synchronous>, transform_indices = @transform_1, window_bounds = array<i64: 128, 128>}, {pipeline_mode = #tpu.pipeline_mode<synchronous>, transform_indices = @transform_2, window_bounds = array<i64: 1, 128>}, {pipeline_mode = #tpu.pipeline_mode<synchronous>, transform_indices = @transform_3, window_bounds = array<i64: 128, 128>}, {pipeline_mode = #tpu.pipeline_mode<synchronous>, transform_indices = @transform_4, window_bounds = array<i64: 1, 128>}, {pipeline_mode = #tpu.pipeline_mode<synchronous>, transform_indices = @transform_5, window_bounds = array<i64: 128, 128>}, {pipeline_mode = #tpu.pipeline_mode<synchronous>, transform_indices = @transform_6, window_bounds = array<i64: 1, 128>}, {pipeline_mode = #tpu.pipeline_mode<synchronous>, transform_indices = @transform_7, window_bounds = array<i64: 8, 128>}]} {
    %c0 = arith.constant 0 : index
    %0 = memref.load %arg1[%c0] : memref<8xi32, #tpu.memory_space<smem>>
    %1 = arith.index_cast %0 : i32 to index
    %c0_0 = arith.constant 0 : index
    %2 = vector.load %arg2[%1, %c0_0] : memref<24x128xf32, #tpu.memory_space<vmem>>, vector<1x128xf32>
    %c0_1 = arith.constant 0 : index
    %c0_2 = arith.constant 0 : index
    %3 = vector.load %arg10[%c0_1, %c0_2] : memref<8x128xf32, #tpu.memory_space<vmem>>, vector<1x128xf32>
    tpu.vector_store %arg10[%c0_1, %c0_2], %2 {strides = array<i32>} : memref<8x128xf32, #tpu.memory_space<vmem>>, vector<1x128xf32>,
    %c1 = arith.constant 1 : index
    %4 = memref.load %arg1[%c1] : memref<8xi32, #tpu.memory_space<smem>>
    %5 = arith.index_cast %4 : i32 to index
    %c0_3 = arith.constant 0 : index
    %6 = vector.load %arg2[%5, %c0_3] : memref<24x128xf32, #tpu.memory_space<vmem>>, vector<1x128xf32>
    %c1_4 = arith.constant 1 : index
    %c0_5 = arith.constant 0 : index
    %7 = vector.load %arg10[%c1_4, %c0_5] : memref<8x128xf32, #tpu.memory_space<vmem>>, vector<1x128xf32>
    tpu.vector_store %arg10[%c1_4, %c0_5], %6 {strides = array<i32>} : memref<8x128xf32, #tpu.memory_space<vmem>>, vector<1x128xf32>,
    %c2 = arith.constant 2 : index
    %8 = memref.load %arg1[%c2] : memref<8xi32, #tpu.memory_space<smem>>
    %9 = arith.index_cast %8 : i32 to index
    %c0_6 = arith.constant 0 : index
    %10 = vector.load %arg2[%9, %c0_6] : memref<24x128xf32, #tpu.memory_space<vmem>>, vector<1x128xf32>
    %c2_7 = arith.constant 2 : index
    %c0_8 = arith.constant 0 : index
    %11 = vector.load %arg10[%c2_7, %c0_8] : memref<8x128xf32, #tpu.memory_space<vmem>>, vector<1x128xf32>
    tpu.vector_store %arg10[%c2_7, %c0_8], %10 {strides = array<i32>} : memref<8x128xf32, #tpu.memory_space<vmem>>, vector<1x128xf32>,
    %c3 = arith.constant 3 : index
    %12 = memref.load %arg1[%c3] : memref<8xi32, #tpu.memory_space<smem>>
    %13 = arith.index_cast %12 : i32 to index
    %c0_9 = arith.constant 0 : index
    %14 = vector.load %arg2[%13, %c0_9] : memref<24x128xf32, #tpu.memory_space<vmem>>, vector<1x128xf32>
    %c3_10 = arith.constant 3 : index
    %c0_11 = arith.constant 0 : index
    %15 = vector.load %arg10[%c3_10, %c0_11] : memref<8x128xf32, #tpu.memory_space<vmem>>, vector<1x128xf32>
    tpu.vector_store %arg10[%c3_10, %c0_11], %14 {strides = array<i32>} : memref<8x128xf32, #tpu.memory_space<vmem>>, vector<1x128xf32>,
    %c4 = arith.constant 4 : index
    %16 = memref.load %arg1[%c4] : memref<8xi32, #tpu.memory_space<smem>>
    %17 = arith.index_cast %16 : i32 to index
    %c0_12 = arith.constant 0 : index
    %18 = vector.load %arg2[%17, %c0_12] : memref<24x128xf32, #tpu.memory_space<vmem>>, vector<1x128xf32>
    %c4_13 = arith.constant 4 : index
    %c0_14 = arith.constant 0 : index
    %19 = vector.load %arg10[%c4_13, %c0_14] : memref<8x128xf32, #tpu.memory_space<vmem>>, vector<1x128xf32>
    tpu.vector_store %arg10[%c4_13, %c0_14], %18 {strides = array<i32>} : memref<8x128xf32, #tpu.memory_space<vmem>>, vector<1x128xf32>,
    %c5 = arith.constant 5 : index
    %20 = memref.load %arg1[%c5] : memref<8xi32, #tpu.memory_space<smem>>
    %21 = arith.index_cast %20 : i32 to index
    %c0_15 = arith.constant 0 : index
    %22 = vector.load %arg2[%21, %c0_15] : memref<24x128xf32, #tpu.memory_space<vmem>>, vector<1x128xf32>
    %c5_16 = arith.constant 5 : index
    %c0_17 = arith.constant 0 : index
    %23 = vector.load %arg10[%c5_16, %c0_17] : memref<8x128xf32, #tpu.memory_space<vmem>>, vector<1x128xf32>
    tpu.vector_store %arg10[%c5_16, %c0_17], %22 {strides = array<i32>} : memref<8x128xf32, #tpu.memory_space<vmem>>, vector<1x128xf32>,
    %c6 = arith.constant 6 : index
    %24 = memref.load %arg1[%c6] : memref<8xi32, #tpu.memory_space<smem>>
    %25 = arith.index_cast %24 : i32 to index
    %c0_18 = arith.constant 0 : index
    %26 = vector.load %arg2[%25, %c0_18] : memref<24x128xf32, #tpu.memory_space<vmem>>, vector<1x128xf32>
    %c6_19 = arith.constant 6 : index
    %c0_20 = arith.constant 0 : index
    %27 = vector.load %arg10[%c6_19, %c0_20] : memref<8x128xf32, #tpu.memory_space<vmem>>, vector<1x128xf32>
    tpu.vector_store %arg10[%c6_19, %c0_20], %26 {strides = array<i32>} : memref<8x128xf32, #tpu.memory_space<vmem>>, vector<1x128xf32>,
    %c7 = arith.constant 7 : index
    %28 = memref.load %arg1[%c7] : memref<8xi32, #tpu.memory_space<smem>>
    %29 = arith.index_cast %28 : i32 to index
    %c0_21 = arith.constant 0 : index
    %30 = vector.load %arg2[%29, %c0_21] : memref<24x128xf32, #tpu.memory_space<vmem>>, vector<1x128xf32>
    %c7_22 = arith.constant 7 : index
    %c0_23 = arith.constant 0 : index
    %31 = vector.load %arg10[%c7_22, %c0_23] : memref<8x128xf32, #tpu.memory_space<vmem>>, vector<1x128xf32>
    tpu.vector_store %arg10[%c7_22, %c0_23], %30 {strides = array<i32>} : memref<8x128xf32, #tpu.memory_space<vmem>>, vector<1x128xf32>,
    %c0_24 = arith.constant 0 : index
    %c0_25 = arith.constant 0 : index
    %32 = vector.load %arg10[%c0_24, %c0_25] : memref<8x128xf32, #tpu.memory_space<vmem>>, vector<8x128xf32>
    %c0_26 = arith.constant 0 : index
    %c0_27 = arith.constant 0 : index
    %33 = vector.load %arg3[%c0_26, %c0_27] : memref<128x128xf32, #tpu.memory_space<vmem>>, vector<128x128xf32>
    %c0_28 = arith.constant 0 : index
    %c0_29 = arith.constant 0 : index
    %34 = vector.load %arg4[%c0_28, %c0_29] : memref<1x128xf32, #tpu.memory_space<vmem>>, vector<1x128xf32>
    %cst = arith.constant dense<0.000000e+00> : vector<8x128xf32>
    %35 = tpu.matmul %32, %33, %cst {dimension_numbers = #tpu.dot_dimension_numbers<[1], [0], [0], [1], [0, 0, 1, 1], [], []>} : vector<8x128xf32>, vector<128x128xf32>, vector<8x128xf32> -> vector<8x128xf32>
    %36 = vector.broadcast %34 : vector<1x128xf32> to vector<8x128xf32>
    %37 = arith.addf %35, %36 : vector<8x128xf32>
    %cst_30 = arith.constant 0.000000e+00 : f32
    %38 = vector.broadcast %cst_30 : f32 to vector<8x128xf32>
    %39 = arith.maximumf %37, %38 : vector<8x128xf32>
    %c0_31 = arith.constant 0 : index
    %c0_32 = arith.constant 0 : index
    %40 = vector.load %arg5[%c0_31, %c0_32] : memref<128x128xf32, #tpu.memory_space<vmem>>, vector<128x128xf32>
    %c0_33 = arith.constant 0 : index
    %c0_34 = arith.constant 0 : index
    %41 = vector.load %arg6[%c0_33, %c0_34] : memref<1x128xf32, #tpu.memory_space<vmem>>, vector<1x128xf32>
    %cst_35 = arith.constant dense<0.000000e+00> : vector<8x128xf32>
    %42 = tpu.matmul %39, %40, %cst_35 {dimension_numbers = #tpu.dot_dimension_numbers<[1], [0], [0], [1], [0, 0, 1, 1], [], []>} : vector<8x128xf32>, vector<128x128xf32>, vector<8x128xf32> -> vector<8x128xf32>
    %43 = vector.broadcast %41 : vector<1x128xf32> to vector<8x128xf32>
    %44 = arith.addf %42, %43 : vector<8x128xf32>
    %cst_36 = arith.constant 0.000000e+00 : f32
    %45 = vector.broadcast %cst_36 : f32 to vector<8x128xf32>
    %46 = arith.maximumf %44, %45 : vector<8x128xf32>
    %c0_37 = arith.constant 0 : index
    %c0_38 = arith.constant 0 : index
    %47 = vector.load %arg7[%c0_37, %c0_38] : memref<128x128xf32, #tpu.memory_space<vmem>>, vector<128x128xf32>
    %c0_39 = arith.constant 0 : index
    %c0_40 = arith.constant 0 : index
    %48 = vector.load %arg8[%c0_39, %c0_40] : memref<1x128xf32, #tpu.memory_space<vmem>>, vector<1x128xf32>
    %cst_41 = arith.constant dense<0.000000e+00> : vector<8x128xf32>
    %49 = tpu.matmul %46, %47, %cst_41 {dimension_numbers = #tpu.dot_dimension_numbers<[1], [0], [0], [1], [0, 0, 1, 1], [], []>} : vector<8x128xf32>, vector<128x128xf32>, vector<8x128xf32> -> vector<8x128xf32>
    %50 = vector.broadcast %48 : vector<1x128xf32> to vector<8x128xf32>
    %51 = arith.addf %49, %50 : vector<8x128xf32>
    %c0_42 = arith.constant 0 : index
    %c0_43 = arith.constant 0 : index
    %52 = vector.load %arg9[%c0_42, %c0_43] : memref<8x128xf32, #tpu.memory_space<vmem>>, vector<8x128xf32>
    tpu.vector_store %arg9[%c0_42, %c0_43], %51 {strides = array<i32>} : memref<8x128xf32, #tpu.memory_space<vmem>>, vector<8x128xf32>,
    return
  }
  func.func @transform_0(%arg0: i32, %arg1: memref<8xi32, #tpu.memory_space<smem>>) -> (i32, i32) {
    %c0_i32 = arith.constant 0 : i32
    %c0_i32_0 = arith.constant 0 : i32
    %c0_i32_1 = arith.constant 0 : i32
    return %c0_i32, %c0_i32_0 : i32, i32
  }
  func.func @transform_1(%arg0: i32, %arg1: memref<8xi32, #tpu.memory_space<smem>>) -> (i32, i32) {
    %c0_i32 = arith.constant 0 : i32
    %c0_i32_0 = arith.constant 0 : i32
    %c0_i32_1 = arith.constant 0 : i32
    return %c0_i32, %c0_i32_0 : i32, i32
  }
  func.func @transform_2(%arg0: i32, %arg1: memref<8xi32, #tpu.memory_space<smem>>) -> (i32, i32) {
    %c0_i32 = arith.constant 0 : i32
    %c0_i32_0 = arith.constant 0 : i32
    %c0_i32_1 = arith.constant 0 : i32
    return %c0_i32, %c0_i32_0 : i32, i32
  }
  func.func @transform_3(%arg0: i32, %arg1: memref<8xi32, #tpu.memory_space<smem>>) -> (i32, i32) {
    %c0_i32 = arith.constant 0 : i32
    %c0_i32_0 = arith.constant 0 : i32
    %c0_i32_1 = arith.constant 0 : i32
    return %c0_i32, %c0_i32_0 : i32, i32
  }
  func.func @transform_4(%arg0: i32, %arg1: memref<8xi32, #tpu.memory_space<smem>>) -> (i32, i32) {
    %c0_i32 = arith.constant 0 : i32
    %c0_i32_0 = arith.constant 0 : i32
    %c0_i32_1 = arith.constant 0 : i32
    return %c0_i32, %c0_i32_0 : i32, i32
  }
  func.func @transform_5(%arg0: i32, %arg1: memref<8xi32, #tpu.memory_space<smem>>) -> (i32, i32) {
    %c0_i32 = arith.constant 0 : i32
    %c0_i32_0 = arith.constant 0 : i32
    %c0_i32_1 = arith.constant 0 : i32
    return %c0_i32, %c0_i32_0 : i32, i32
  }
  func.func @transform_6(%arg0: i32, %arg1: memref<8xi32, #tpu.memory_space<smem>>) -> (i32, i32) {
    %c0_i32 = arith.constant 0 : i32
    %c0_i32_0 = arith.constant 0 : i32
    %c0_i32_1 = arith.constant 0 : i32
    return %c0_i32, %c0_i32_0 : i32, i32
  }
  func.func @transform_7(%arg0: i32, %arg1: memref<8xi32, #tpu.memory_space<smem>>) -> (i32, i32) {
    %c0_i32 = arith.constant 0 : i32
    %c0_i32_0 = arith.constant 0 : i32
    %c0_i32_1 = arith.constant 0 : i32
    return %c0_i32, %c0_i32_0 : i32, i32
  }
}

</mosaic_0001>

<llo_original>
// kernel: tpu_custom_call.1
$region0: #{tpu_custom_call.1}
  #allocation0 [shape = 'u32[]', space=smem, size = 0x4, offset = 0x4, fixed_abs, tag = 'smem constant byte address 0x4 - core index']
  #allocation1 [shape = 'u32[144,128]{1,0:T(1,128)}', space=vmem, size = 0x12000, scoped, tag = 'internal scratch']
  #allocation2 [shape = 'f32[8,128]{1,0:T(8,128)}', space=vmem, size = 0x1000, scoped, tag = 'scratch operand']
  #allocation3 [shape = 's32[1]{0}', space=sflag, size = 0x4, scoped, tag = 'scoped memory for tpu_custom_call.1']
  #allocation4 [shape = 'u8[512]{0}', space=smem, size = 0x200, scoped, tag = 'prefetched SMEM operand 0']
  %s0 = inlined_call_operand.hbm [shape: s32[8], index: 0, kind: input, shape index: {}]
  %s1 = inlined_call_operand.hbm [shape: f32[24,128], index: 1, kind: input, shape index: {}]
  %s2 = inlined_call_operand.hbm [shape: f32[128,128], index: 2, kind: input, shape index: {}]
  %s3 = inlined_call_operand.vmem [shape: f32[1,128], index: 3, kind: input, shape index: {}]
  %s4 = inlined_call_operand.hbm [shape: f32[128,128], index: 4, kind: input, shape index: {}]
  %s5 = inlined_call_operand.vmem [shape: f32[1,128], index: 5, kind: input, shape index: {}]
  %s6 = inlined_call_operand.hbm [shape: f32[128,128], index: 6, kind: input, shape index: {}]
  %s7 = inlined_call_operand.vmem [shape: f32[1,128], index: 7, kind: input, shape index: {}]
  %s8 = inlined_call_operand.hbm [shape: f32[8,128], index: 8, kind: output, shape index: {}]
  %s9 = sld [smem:[#allocation0]]
  $region54: #{tpu_custom_call.1} parent=0
    _
  %s11 = ssub.s32 1, %s9
  %s12 = scalar_select 0, %s11, %s9
  %14 = dma.hbm_to_smem %s0, 16, [#allocation4], [#allocation3]
  %15 = dma.done [#allocation3], 16
  %16 = sfence
  $region1: #{tpu_custom_call.1} parent=0
    #allocation5 [shape = 'u8[12288]{0}', space=vmem, size = 0x3000, scoped, tag = 'input window, operand 1, single buffered']
    #allocation6 [shape = 's32[1]{0}', space=sflag, size = 0x4, scoped, tag = 'scoped memory for tpu_custom_call.1']
    #allocation7 [shape = 's32[1]{0}', space=sflag, size = 0x4, scoped, tag = 'scoped memory for tpu_custom_call.1']
    #allocation8 [shape = 'u8[65536]{0}', space=vmem, size = 0x10000, scoped, tag = 'input window, operand 2, single buffered']
    #allocation9 [shape = 's32[1]{0}', space=sflag, size = 0x4, scoped, tag = 'scoped memory for tpu_custom_call.1']
    #allocation10 [shape = 'u8[65536]{0}', space=vmem, size = 0x10000, scoped, tag = 'input window, operand 4, single buffered']
    #allocation11 [shape = 'u8[65536]{0}', space=vmem, size = 0x10000, scoped, tag = 'input window, operand 6, single buffered']
    #allocation12 [shape = 's32[1]{0}', space=sflag, size = 0x4, scoped, tag = 'scoped memory for tpu_custom_call.1']
    #allocation13 [shape = 'u8[4096]{0}', space=vmem, size = 0x1000, scoped, tag = 'output window, operand 0, single buffered']
    %17 = vsyncpa [#allocation6], 0
    %18 = vsyncpa [#allocation9], 0
    %19 = vsyncpa [#allocation12], 0
    %20 = vsyncpa [#allocation7], 0
    // Predicated region
    $region2: #{tpu_custom_call.1} parent=1 // pred_check
      _
    $region3: #{tpu_custom_call.1} parent=1 // pred_check_branch
      %22 = sbr.rel (0) target = $region5
    $region4: #{tpu_custom_call.1} parent=1 // pred_region
      %s24 = ssub.s32 384, 384
      %25 = vsyncadd [#allocation6], %s24
      %s26 = sshll.u32 [#allocation5], 4
      %s27 = int_to_ptr.vmem [resolvable:$true] %s26
      %32 = dma.hbm_to_vmem [thread:$0]  %s1, 384, %s27, [#allocation6], 128, 128, 8
    $region5: #{tpu_custom_call.1} parent=1 // pred_fallthru
      _
    // Predicated region
    $region6: #{tpu_custom_call.1} parent=1 // pred_check
      _
    $region7: #{tpu_custom_call.1} parent=1 // pred_check_branch
      %34 = sbr.rel (0) target = $region9
    $region8: #{tpu_custom_call.1} parent=1 // pred_region
      %s36 = ssub.s32 2048, 2048
      %37 = vsyncadd [#allocation9], %s36
      %s38 = sshll.u32 [#allocation8], 4
      %s39 = int_to_ptr.vmem [resolvable:$true] %s38
      %44 = dma.hbm_to_vmem [thread:$0]  %s2, 2048, %s39, [#allocation9], 128, 128, 8
    $region9: #{tpu_custom_call.1} parent=1 // pred_fallthru
      _
    // Predicated region
    $region10: #{tpu_custom_call.1} parent=1 // pred_check
      _
    $region11: #{tpu_custom_call.1} parent=1 // pred_check_branch
      %46 = sbr.rel (0) target = $region13
    $region12: #{tpu_custom_call.1} parent=1 // pred_region
      _
    $region13: #{tpu_custom_call.1} parent=1 // pred_fallthru
      _
    // Predicated region
    $region14: #{tpu_custom_call.1} parent=1 // pred_check
      _
    $region15: #{tpu_custom_call.1} parent=1 // pred_check_branch
      %48 = sbr.rel (0) target = $region17
    $region16: #{tpu_custom_call.1} parent=1 // pred_region
      %s50 = ssub.s32 2048, 2048
      %51 = vsyncadd [#allocation9], %s50
      %s52 = sshll.u32 [#allocation10], 4
      %s53 = int_to_ptr.vmem [resolvable:$true] %s52
      %58 = dma.hbm_to_vmem [thread:$0]  %s4, 2048, %s53, [#allocation9], 128, 128, 8
    $region17: #{tpu_custom_call.1} parent=1 // pred_fallthru
      _
    // Predicated region
    $region18: #{tpu_custom_call.1} parent=1 // pred_check
      _
    $region19: #{tpu_custom_call.1} parent=1 // pred_check_branch
      %60 = sbr.rel (0) target = $region21
    $region20: #{tpu_custom_call.1} parent=1 // pred_region
      _
    $region21: #{tpu_custom_call.1} parent=1 // pred_fallthru
      _
    // Predicated region
    $region22: #{tpu_custom_call.1} parent=1 // pred_check
      _
    $region23: #{tpu_custom_call.1} parent=1 // pred_check_branch
      %62 = sbr.rel (0) target = $region25
    $region24: #{tpu_custom_call.1} parent=1 // pred_region
      %s64 = ssub.s32 2048, 2048
      %65 = vsyncadd [#allocation12], %s64
      %s66 = sshll.u32 [#allocation11], 4
      %s67 = int_to_ptr.vmem [resolvable:$true] %s66
      %72 = dma.hbm_to_vmem [thread:$0]  %s6, 2048, %s67, [#allocation12], 128, 128, 8
    $region25: #{tpu_custom_call.1} parent=1 // pred_fallthru
      _
    // Predicated region
    $region26: #{tpu_custom_call.1} parent=1 // pred_check
      _
    $region27: #{tpu_custom_call.1} parent=1 // pred_check_branch
      %74 = sbr.rel (0) target = $region29
    $region28: #{tpu_custom_call.1} parent=1 // pred_region
      _
    $region29: #{tpu_custom_call.1} parent=1 // pred_fallthru
      _
    // Predicated region
    $region30: #{tpu_custom_call.1} parent=1 // pred_check
      _
    $region31: #{tpu_custom_call.1} parent=1 // pred_check_branch
      %76 = sbr.rel (0) target = $region33
    $region32: #{tpu_custom_call.1} parent=1 // pred_region
      %77 = dma.done [#allocation6], 384
    $region33: #{tpu_custom_call.1} parent=1 // pred_fallthru
      _
    // Predicated region
    $region34: #{tpu_custom_call.1} parent=1 // pred_check
      _
    $region35: #{tpu_custom_call.1} parent=1 // pred_check_branch
      %79 = sbr.rel (0) target = $region37
    $region36: #{tpu_custom_call.1} parent=1 // pred_region
      %80 = dma.done [#allocation9], 2048
    $region37: #{tpu_custom_call.1} parent=1 // pred_fallthru
      _
    // Predicated region
    $region38: #{tpu_custom_call.1} parent=1 // pred_check
      _
    $region39: #{tpu_custom_call.1} parent=1 // pred_check_branch
      %82 = sbr.rel (0) target = $region41
    $region40: #{tpu_custom_call.1} parent=1 // pred_region
      %83 = dma.done [#allocation9], 2048
    $region41: #{tpu_custom_call.1} parent=1 // pred_fallthru
      _
    // Predicated region
    $region42: #{tpu_custom_call.1} parent=1 // pred_check
      _
    $region43: #{tpu_custom_call.1} parent=1 // pred_check_branch
      %85 = sbr.rel (0) target = $region45
    $region44: #{tpu_custom_call.1} parent=1 // pred_region
      %86 = dma.done [#allocation12], 2048
    $region45: #{tpu_custom_call.1} parent=1 // pred_fallthru
      _
    %s87 = sld [smem:[#allocation4]]
    %s88 = scalar_lea.vmem [#allocation5], %s87
    %v89 = vld [vmem:[%s88] sm:$0x1]
    %90 = vst [vmem:[#allocation2] sm:$0x1] %v89
    %s91 = sld [smem:[#allocation4 + $0x1]]
    %s92 = scalar_lea.vmem [#allocation5], %s91
    %v93 = vld [vmem:[%s92] sm:$0x1]
    %94 = vst [vmem:[#allocation2 + $0x1] sm:$0x1] %v93
    %s95 = sld [smem:[#allocation4 + $0x2]]
    %s96 = scalar_lea.vmem [#allocation5], %s95
    %v97 = vld [vmem:[%s96] sm:$0x1]
    %98 = vst [vmem:[#allocation2 + $0x2] sm:$0x1] %v97
    %s99 = sld [smem:[#allocation4 + $0x3]]
    %s100 = scalar_lea.vmem [#allocation5], %s99
    %v101 = vld [vmem:[%s100] sm:$0x1]
    %102 = vst [vmem:[#allocation2 + $0x3] sm:$0x1] %v101
    %s103 = sld [smem:[#allocation4 + $0x4]]
    %s104 = scalar_lea.vmem [#allocation5], %s103
    %v105 = vld [vmem:[%s104] sm:$0x1]
    %106 = vst [vmem:[#allocation2 + $0x4] sm:$0x1] %v105
    %s107 = sld [smem:[#allocation4 + $0x5]]
    %s108 = scalar_lea.vmem [#allocation5], %s107
    %v109 = vld [vmem:[%s108] sm:$0x1]
    %110 = vst [vmem:[#allocation2 + $0x5] sm:$0x1] %v109
    %s111 = sld [smem:[#allocation4 + $0x6]]
    %s112 = scalar_lea.vmem [#allocation5], %s111
    %v113 = vld [vmem:[%s112] sm:$0x1]
    %114 = vst [vmem:[#allocation2 + $0x6] sm:$0x1] %v113
    %s115 = sld [smem:[#allocation4 + $0x7]]
    %s116 = scalar_lea.vmem [#allocation5], %s115
    %v117 = vld [vmem:[%s116] sm:$0x1]
    %118 = vst [vmem:[#allocation2 + $0x7] sm:$0x1] %v117
    %v119 = vld [vmem:[#allocation2] sm:$0xff]
    %v120 = vld [vmem:[#allocation8] sm:$0xff]
    %v121 = vld [vmem:[#allocation8 + $0x8] sm:$0xff]
    %v122 = vld [vmem:[#allocation8 + $0x10] sm:$0xff]
    %v123 = vld [vmem:[#allocation8 + $0x18] sm:$0xff]
    %v124 = vld [vmem:[#allocation8 + $0x20] sm:$0xff]
    %v125 = vld [vmem:[#allocation8 + $0x28] sm:$0xff]
    %v126 = vld [vmem:[#allocation8 + $0x30] sm:$0xff]
    %v127 = vld [vmem:[#allocation8 + $0x38] sm:$0xff]
    %v128 = vld [vmem:[#allocation8 + $0x40] sm:$0xff]
    %v129 = vld [vmem:[#allocation8 + $0x48] sm:$0xff]
    %v130 = vld [vmem:[#allocation8 + $0x50] sm:$0xff]
    %v131 = vld [vmem:[#allocation8 + $0x58] sm:$0xff]
    %v132 = vld [vmem:[#allocation8 + $0x60] sm:$0xff]
    %v133 = vld [vmem:[#allocation8 + $0x68] sm:$0xff]
    %v134 = vld [vmem:[#allocation8 + $0x70] sm:$0xff]
    %v135 = vld [vmem:[#allocation8 + $0x78] sm:$0xff]
    %v136 = vld [vmem:[%s3] sm:$0x1]
    %v138 = vlaneseq
    %v139 = vshrl.u32 %v138, 7
    %v140 = vsub.s32 0, %v139
    %v141 = vrot.slane %v136, %v140
    %143 = vmatprep.subr.mxu0 0.0
    %144 = vmatpush1.msra.mxu0 %v135
    %145 = vmatprep.subr.mxu0 0.0
    %146 = vmatpush1.msra.mxu0 %v134
    %147 = vmatprep.subr.mxu0 0.0
    %148 = vmatpush1.msra.mxu0 %v133
    %149 = vmatprep.subr.mxu0 0.0
    %150 = vmatpush1.msra.mxu0 %v132
    %151 = vmatprep.subr.mxu0 0.0
    %152 = vmatpush1.msra.mxu0 %v131
    %153 = vmatprep.subr.mxu0 0.0
    %154 = vmatpush1.msra.mxu0 %v130
    %155 = vmatprep.subr.mxu0 0.0
    %156 = vmatpush1.msra.mxu0 %v129
    %157 = vmatprep.subr.mxu0 0.0
    %158 = vmatpush1.msra.mxu0 %v128
    %159 = vmatprep.subr.mxu0 0.0
    %160 = vmatpush1.msra.mxu0 %v127
    %161 = vmatprep.subr.mxu0 0.0
    %162 = vmatpush1.msra.mxu0 %v126
    %163 = vmatprep.subr.mxu0 0.0
    %164 = vmatpush1.msra.mxu0 %v125
    %165 = vmatprep.subr.mxu0 0.0
    %166 = vmatpush1.msra.mxu0 %v124
    %167 = vmatprep.subr.mxu0 0.0
    %168 = vmatpush1.msra.mxu0 %v123
    %169 = vmatprep.subr.mxu0 0.0
    %170 = vmatpush1.msra.mxu0 %v122
    %171 = vmatprep.subr.mxu0 0.0
    %172 = vmatpush1.msra.mxu0 %v121
    %173 = vmatprep.subr.mxu0 0.0
    %174 = vmatpush1.msra.mxu0 %v120
    %175 = vmatprep.subr.mxu0 0.0
    %176 = vmatpush2.msra.mxu0 0.0
    %177 = vmatprep.subr.mxu0 0.0
    %178 = vmatpush2.msra.mxu0 0.0
    %179 = vmatprep.subr.mxu0 0.0
    %180 = vmatpush2.msra.mxu0 0.0
    %181 = vmatprep.subr.mxu0 0.0
    %182 = vmatpush2.msra.mxu0 0.0
    %183 = vmatprep.subr.mxu0 0.0
    %184 = vmatpush2.msra.mxu0 0.0
    %185 = vmatprep.subr.mxu0 0.0
    %186 = vmatpush2.msra.mxu0 0.0
    %187 = vmatprep.subr.mxu0 0.0
    %188 = vmatpush2.msra.mxu0 0.0
    %189 = vmatprep.subr.mxu0 0.0
    %190 = vmatpush2.msra.mxu0 0.0
    %191 = vmatprep.subr.mxu0 0.0
    %192 = vmatpush2.msra.mxu0 0.0
    %193 = vmatprep.subr.mxu0 0.0
    %194 = vmatpush2.msra.mxu0 0.0
    %195 = vmatprep.subr.mxu0 0.0
    %196 = vmatpush2.msra.mxu0 0.0
    %197 = vmatprep.subr.mxu0 0.0
    %198 = vmatpush2.msra.mxu0 0.0
    %199 = vmatprep.subr.mxu0 0.0
    %200 = vmatpush2.msra.mxu0 0.0
    %201 = vmatprep.subr.mxu0 0.0
    %202 = vmatpush2.msra.mxu0 0.0
    %203 = vmatprep.subr.mxu0 0.0
    %204 = vmatpush2.msra.mxu0 0.0
    %205 = vmatprep.subr.mxu0 0.0
    %206 = vmatpush2.msra.mxu0 0.0
    %207 = vmatprep.mubr.f32.mxu0 0.0
    %208 = vmatmul.mubr.f32.gmra.mxu0 %v119
    %v209 = vpop.f32.mrf.mxu0
    %v210 = vadd.f32 %v141, %v209
    %v211 = vpop.f32.mrf.mxu0
    %212 = vdwg.mxu0
    %v213 = vmax.f32 %v210, 0.0
    %v214 = vld [vmem:[#allocation10] sm:$0xff]
    %v215 = vld [vmem:[#allocation10 + $0x8] sm:$0xff]
    %v216 = vld [vmem:[#allocation10 + $0x10] sm:$0xff]
    %v217 = vld [vmem:[#allocation10 + $0x18] sm:$0xff]
    %v218 = vld [vmem:[#allocation10 + $0x20] sm:$0xff]
    %v219 = vld [vmem:[#allocation10 + $0x28] sm:$0xff]
    %v220 = vld [vmem:[#allocation10 + $0x30] sm:$0xff]
    %v221 = vld [vmem:[#allocation10 + $0x38] sm:$0xff]
    %v222 = vld [vmem:[#allocation10 + $0x40] sm:$0xff]
    %v223 = vld [vmem:[#allocation10 + $0x48] sm:$0xff]
    %v224 = vld [vmem:[#allocation10 + $0x50] sm:$0xff]
    %v225 = vld [vmem:[#allocation10 + $0x58] sm:$0xff]
    %v226 = vld [vmem:[#allocation10 + $0x60] sm:$0xff]
    %v227 = vld [vmem:[#allocation10 + $0x68] sm:$0xff]
    %v228 = vld [vmem:[#allocation10 + $0x70] sm:$0xff]
    %v229 = vld [vmem:[#allocation10 + $0x78] sm:$0xff]
    %v230 = vld [vmem:[%s5] sm:$0x1]
    %v232 = vlaneseq
    %v233 = vshrl.u32 %v232, 7
    %v234 = vsub.s32 0, %v233
    %v235 = vrot.slane %v230, %v234
    %237 = vmatprep.subr.mxu0 0.0
    %238 = vmatpush1.msra.mxu0 %v229
    %239 = vmatprep.subr.mxu0 0.0
    %240 = vmatpush1.msra.mxu0 %v228
    %241 = vmatprep.subr.mxu0 0.0
    %242 = vmatpush1.msra.mxu0 %v227
    %243 = vmatprep.subr.mxu0 0.0
    %244 = vmatpush1.msra.mxu0 %v226
    %245 = vmatprep.subr.mxu0 0.0
    %246 = vmatpush1.msra.mxu0 %v225
    %247 = vmatprep.subr.mxu0 0.0
    %248 = vmatpush1.msra.mxu0 %v224
    %249 = vmatprep.subr.mxu0 0.0
    %250 = vmatpush1.msra.mxu0 %v223
    %251 = vmatprep.subr.mxu0 0.0
    %252 = vmatpush1.msra.mxu0 %v222
    %253 = vmatprep.subr.mxu0 0.0
    %254 = vmatpush1.msra.mxu0 %v221
    %255 = vmatprep.subr.mxu0 0.0
    %256 = vmatpush1.msra.mxu0 %v220
    %257 = vmatprep.subr.mxu0 0.0
    %258 = vmatpush1.msra.mxu0 %v219
    %259 = vmatprep.subr.mxu0 0.0
    %260 = vmatpush1.msra.mxu0 %v218
    %261 = vmatprep.subr.mxu0 0.0
    %262 = vmatpush1.msra.mxu0 %v217
    %263 = vmatprep.subr.mxu0 0.0
    %264 = vmatpush1.msra.mxu0 %v216
    %265 = vmatprep.subr.mxu0 0.0
    %266 = vmatpush1.msra.mxu0 %v215
    %267 = vmatprep.subr.mxu0 0.0
    %268 = vmatpush1.msra.mxu0 %v214
    %269 = vmatprep.subr.mxu0 0.0
    %270 = vmatpush2.msra.mxu0 0.0
    %271 = vmatprep.subr.mxu0 0.0
    %272 = vmatpush2.msra.mxu0 0.0
    %273 = vmatprep.subr.mxu0 0.0
    %274 = vmatpush2.msra.mxu0 0.0
    %275 = vmatprep.subr.mxu0 0.0
    %276 = vmatpush2.msra.mxu0 0.0
    %277 = vmatprep.subr.mxu0 0.0
    %278 = vmatpush2.msra.mxu0 0.0
    %279 = vmatprep.subr.mxu0 0.0
    %280 = vmatpush2.msra.mxu0 0.0
    %281 = vmatprep.subr.mxu0 0.0
    %282 = vmatpush2.msra.mxu0 0.0
    %283 = vmatprep.subr.mxu0 0.0
    %284 = vmatpush2.msra.mxu0 0.0
    %285 = vmatprep.subr.mxu0 0.0
    %286 = vmatpush2.msra.mxu0 0.0
    %287 = vmatprep.subr.mxu0 0.0
    %288 = vmatpush2.msra.mxu0 0.0
    %289 = vmatprep.subr.mxu0 0.0
    %290 = vmatpush2.msra.mxu0 0.0
    %291 = vmatprep.subr.mxu0 0.0
    %292 = vmatpush2.msra.mxu0 0.0
    %293 = vmatprep.subr.mxu0 0.0
    %294 = vmatpush2.msra.mxu0 0.0
    %295 = vmatprep.subr.mxu0 0.0
    %296 = vmatpush2.msra.mxu0 0.0
    %297 = vmatprep.subr.mxu0 0.0
    %298 = vmatpush2.msra.mxu0 0.0
    %299 = vmatprep.subr.mxu0 0.0
    %300 = vmatpush2.msra.mxu0 0.0
    %301 = vmatprep.mubr.f32.mxu0 0.0
    %302 = vmatmul.mubr.f32.gmra.mxu0 %v213
    %v303 = vpop.f32.mrf.mxu0
    %v304 = vadd.f32 %v235, %v303
    %v305 = vpop.f32.mrf.mxu0
    %306 = vdwg.mxu0
    %v307 = vmax.f32 %v304, 0.0
    %v308 = vld [vmem:[#allocation11] sm:$0xff]
    %v309 = vld [vmem:[#allocation11 + $0x8] sm:$0xff]
    %v310 = vld [vmem:[#allocation11 + $0x10] sm:$0xff]
    %v311 = vld [vmem:[#allocation11 + $0x18] sm:$0xff]
    %v312 = vld [vmem:[#allocation11 + $0x20] sm:$0xff]
    %v313 = vld [vmem:[#allocation11 + $0x28] sm:$0xff]
    %v314 = vld [vmem:[#allocation11 + $0x30] sm:$0xff]
    %v315 = vld [vmem:[#allocation11 + $0x38] sm:$0xff]
    %v316 = vld [vmem:[#allocation11 + $0x40] sm:$0xff]
    %v317 = vld [vmem:[#allocation11 + $0x48] sm:$0xff]
    %v318 = vld [vmem:[#allocation11 + $0x50] sm:$0xff]
    %v319 = vld [vmem:[#allocation11 + $0x58] sm:$0xff]
    %v320 = vld [vmem:[#allocation11 + $0x60] sm:$0xff]
    %v321 = vld [vmem:[#allocation11 + $0x68] sm:$0xff]
    %v322 = vld [vmem:[#allocation11 + $0x70] sm:$0xff]
    %v323 = vld [vmem:[#allocation11 + $0x78] sm:$0xff]
    %v324 = vld [vmem:[%s7] sm:$0x1]
    %v326 = vlaneseq
    %v327 = vshrl.u32 %v326, 7
    %v328 = vsub.s32 0, %v327
    %v329 = vrot.slane %v324, %v328
    %331 = vmatprep.subr.mxu0 0.0
    %332 = vmatpush1.msra.mxu0 %v323
    %333 = vmatprep.subr.mxu0 0.0
    %334 = vmatpush1.msra.mxu0 %v322
    %335 = vmatprep.subr.mxu0 0.0
    %336 = vmatpush1.msra.mxu0 %v321
    %337 = vmatprep.subr.mxu0 0.0
    %338 = vmatpush1.msra.mxu0 %v320
    %339 = vmatprep.subr.mxu0 0.0
    %340 = vmatpush1.msra.mxu0 %v319
    %341 = vmatprep.subr.mxu0 0.0
    %342 = vmatpush1.msra.mxu0 %v318
    %343 = vmatprep.subr.mxu0 0.0
    %344 = vmatpush1.msra.mxu0 %v317
    %345 = vmatprep.subr.mxu0 0.0
    %346 = vmatpush1.msra.mxu0 %v316
    %347 = vmatprep.subr.mxu0 0.0
    %348 = vmatpush1.msra.mxu0 %v315
    %349 = vmatprep.subr.mxu0 0.0
    %350 = vmatpush1.msra.mxu0 %v314
    %351 = vmatprep.subr.mxu0 0.0
    %352 = vmatpush1.msra.mxu0 %v313
    %353 = vmatprep.subr.mxu0 0.0
    %354 = vmatpush1.msra.mxu0 %v312
    %355 = vmatprep.subr.mxu0 0.0
    %356 = vmatpush1.msra.mxu0 %v311
    %357 = vmatprep.subr.mxu0 0.0
    %358 = vmatpush1.msra.mxu0 %v310
    %359 = vmatprep.subr.mxu0 0.0
    %360 = vmatpush1.msra.mxu0 %v309
    %361 = vmatprep.subr.mxu0 0.0
    %362 = vmatpush1.msra.mxu0 %v308
    %363 = vmatprep.subr.mxu0 0.0
    %364 = vmatpush2.msra.mxu0 0.0
    %365 = vmatprep.subr.mxu0 0.0
    %366 = vmatpush2.msra.mxu0 0.0
    %367 = vmatprep.subr.mxu0 0.0
    %368 = vmatpush2.msra.mxu0 0.0
    %369 = vmatprep.subr.mxu0 0.0
    %370 = vmatpush2.msra.mxu0 0.0
    %371 = vmatprep.subr.mxu0 0.0
    %372 = vmatpush2.msra.mxu0 0.0
    %373 = vmatprep.subr.mxu0 0.0
    %374 = vmatpush2.msra.mxu0 0.0
    %375 = vmatprep.subr.mxu0 0.0
    %376 = vmatpush2.msra.mxu0 0.0
    %377 = vmatprep.subr.mxu0 0.0
    %378 = vmatpush2.msra.mxu0 0.0
    %379 = vmatprep.subr.mxu0 0.0
    %380 = vmatpush2.msra.mxu0 0.0
    %381 = vmatprep.subr.mxu0 0.0
    %382 = vmatpush2.msra.mxu0 0.0
    %383 = vmatprep.subr.mxu0 0.0
    %384 = vmatpush2.msra.mxu0 0.0
    %385 = vmatprep.subr.mxu0 0.0
    %386 = vmatpush2.msra.mxu0 0.0
    %387 = vmatprep.subr.mxu0 0.0
    %388 = vmatpush2.msra.mxu0 0.0
    %389 = vmatprep.subr.mxu0 0.0
    %390 = vmatpush2.msra.mxu0 0.0
    %391 = vmatprep.subr.mxu0 0.0
    %392 = vmatpush2.msra.mxu0 0.0
    %393 = vmatprep.subr.mxu0 0.0
    %394 = vmatpush2.msra.mxu0 0.0
    %395 = vmatprep.mubr.f32.mxu0 0.0
    %396 = vmatmul.mubr.f32.gmra.mxu0 %v307
    %v397 = vpop.f32.mrf.mxu0
    %v398 = vadd.f32 %v329, %v397
    %v399 = vpop.f32.mrf.mxu0
    %400 = vdwg.mxu0
    %401 = vst [vmem:[#allocation13] sm:$0xff] %v398
    // Predicated region
    $region46: #{tpu_custom_call.1} parent=1 // pred_check
      _
    $region47: #{tpu_custom_call.1} parent=1 // pred_check_branch
      %403 = sbr.rel (0) target = $region49
    $region48: #{tpu_custom_call.1} parent=1 // pred_region
      %s405 = ssub.s32 128, 128
      %406 = vsyncadd [#allocation7], %s405
      %s408 = sshll.u32 [#allocation13], 4
      %s409 = int_to_ptr.vmem [resolvable:$true] %s408
      %411 = dma.vmem_to_hbm [thread:$0]  %s409, 128, %s8, [#allocation7]
    $region49: #{tpu_custom_call.1} parent=1 // pred_fallthru
      _
    // Predicated region
    $region50: #{tpu_custom_call.1} parent=1 // pred_check
      _
    $region51: #{tpu_custom_call.1} parent=1 // pred_check_branch
      %413 = sbr.rel (0) target = $region53
    $region52: #{tpu_custom_call.1} parent=1 // pred_region
      %414 = dma.done [#allocation7], 128
    $region53: #{tpu_custom_call.1} parent=1 // pred_fallthru
      _
    %415 = vsyncpa [#allocation6], 1
    %416 = vsyncpa [#allocation9], 1
    %417 = vsyncpa [#allocation12], 1
    %418 = vsyncpa [#allocation7], 1

</llo_original>
